<compile_context>
chip_gen: v7x
topology: tpu7x:2x2x1
jax: 0.10.0
libtpu: 0.0.40
codegen_flags: <defaults>
</compile_context>

<pallas_src>
import jax
import jax.numpy as jnp
from jax import lax
from jax.experimental import pallas as pl
from jax.experimental.pallas import tpu as pltpu

NEG_SLOPE = 0.2          # GATConv default LeakyReLU negative slope
NEG_INF = -1e30          # finite "-inf" for masked softmax (avoids NaNs)


# --------------------------------------------------------------------------- #
# Preamble (single call, no grid): projections hoisted out of the tiled loop.
#   h       = x @ W1                      (bf16 copy for the MXU aggregation)
#   as_row  = a_src1 . h^T   -> [1, N]    (alpha_src per SOURCE node, lane-dense)
#   ad_col  = h . a_dst1^T   -> [N, 1]    (alpha_dst per TARGET node)
# --------------------------------------------------------------------------- #
def project1_kernel(x_ref, w1_ref, as1_ref, ad1_ref, h_ref, asrow_ref, adcol_ref):
    h = jnp.dot(x_ref[...], w1_ref[...], preferred_element_type=jnp.float32)   # [N, H]
    asrow_ref[...] = lax.dot_general(as1_ref[...], h, (((1,), (1,)), ((), ())),
                                     preferred_element_type=jnp.float32)       # [1, N]
    adcol_ref[...] = jnp.sum(h * ad1_ref[...], axis=-1, keepdims=True)          # [N, 1]
    h_ref[...] = h.astype(jnp.bfloat16)   # cast once here, not once per row tile


# --------------------------------------------------------------------------- #
# Layer 1: GATConv(6 -> 128) attention + ReLU, fused with the W2 projection.
# Row-tiled over target nodes; emits only h2 = relu(h1) @ w2  -> [N, 1].
# --------------------------------------------------------------------------- #
def gat1_kernel(adj_ref, h_ref, asrow_ref, adcol_ref, b1_ref, w2_ref, h2_ref):
    adj = adj_ref[...].astype(jnp.float32)                       # int8 -> f32 mask
    e = adcol_ref[...] + asrow_ref[...]                          # [TM,1]+[1,N] -> [TM,N]
    e = jnp.where(e > 0, e, NEG_SLOPE * e)                       # LeakyReLU
    e = jnp.where(adj > 0.0, e, NEG_INF)                         # mask non-edges
    # Self-loops guarantee a finite row max, so masked entries underflow to exactly 0.
    m = jnp.max(e, axis=-1, keepdims=True)
    p = jnp.exp((e - m).astype(jnp.bfloat16))                    # bf16 EUP exp (v6e/v7x)
    denom = jnp.maximum(jnp.sum(p, axis=-1, keepdims=True, dtype=jnp.float32), 1e-20)

    # Dominant FLOP term: bf16 MXU aggregation, f32 accumulation; normalize after.
    agg = jnp.dot(p, h_ref[...], preferred_element_type=jnp.float32)            # [TM, H]
    h1 = jnp.maximum(agg * pl.reciprocal(denom, approx=True) + b1_ref[...], 0.0)  # ReLU
    # Fused layer-2 projection (f_out == 1): one scalar per node, VPU mul + lane reduce.
    h2_ref[...] = jnp.sum(h1 * w2_ref[...], axis=-1, keepdims=True).astype(h2_ref.dtype)


# --------------------------------------------------------------------------- #
# Layer 2: GATConv(128 -> 1) + Sigmoid, consuming only adj + the h2 vector.
# Everything is VPU/EUP (no MXU); f_out == 1.
# --------------------------------------------------------------------------- #
def gat2_kernel(adj_ref, h2row_ref, h2col_ref, as2_ref, ad2_ref, b2_ref, o_ref):
    adj = adj_ref[...].astype(jnp.float32)
    h2_row = h2row_ref[...]                                      # [1, N] (sources)
    e = h2col_ref[...] * ad2_ref[...] + h2_row * as2_ref[...]    # [TM,1]+[1,N] -> [TM,N]
    e = jnp.where(e > 0, e, NEG_SLOPE * e)                       # LeakyReLU
    e = jnp.where(adj > 0.0, e, NEG_INF)                         # mask non-edges
    m = jnp.max(e, axis=-1, keepdims=True)
    p = jnp.exp((e - m).astype(jnp.bfloat16)).astype(jnp.float32)
    denom = jnp.maximum(jnp.sum(p, axis=-1, keepdims=True), 1e-20)
    agg = jnp.sum(p * h2_row, axis=-1, keepdims=True)            # [TM, 1]
    z = agg * pl.reciprocal(denom, approx=True) + b2_ref[...]
    # Exact sigmoid (the divide is on a [TM,1] tensor -> negligible cost, no bias).
    o_ref[...] = (1.0 / (1.0 + jnp.exp(-z))).astype(o_ref.dtype)


# --------------------------------------------------------------------------- #
# Wrapper
# --------------------------------------------------------------------------- #
def _vmem_limit_bytes():
    # Generation-aware scoped-VMEM budget (v7x has only 64 MiB per TensorCore).
    try:
        cap = int(pltpu.get_tpu_info().vmem_capacity_bytes)
    except Exception:
        cap = 64 * 1024 * 1024   # conservative fallback (v7x per-core VMEM)
    return int(min((cap * 3) // 4, 96 * 1024 * 1024))


def _default_tm(n, adj_itemsize, vmem_limit):
    budget = vmem_limit // 2                 # headroom: resident tensors + scratch
    for cand in (256, 128, 64, 32):          # >= 2 tiles so both v7x TCs get work
        if n % cand != 0 or n // cand < 2:
            continue
        slab = 2 * cand * n * adj_itemsize   # double-buffered int8 adj DMA slabs
        work = 4 * cand * n * 4              # f32 [tm, n] softmax working set
        if slab + work <= budget:
            return cand
    return n


def gcn_forward(x, adj, params, *, tm=None):
    """params = (w1, a_src1, a_dst1, b1, w2, a_src2, a_dst2, b2); adj is int8 [N, N]."""
    w1, a_src1, a_dst1, b1, w2, a_src2, a_dst2, b2 = params
    n, _ = x.shape
    f_hid = w1.shape[1]
    assert adj.dtype == jnp.int8 and adj.shape == (n, n)

    vmem_limit = _vmem_limit_bytes()
    if tm is None:
        tm = _default_tm(n, adj.dtype.itemsize, vmem_limit)
    assert n % tm == 0, "row tile must divide N"
    assert tm == n or tm % 32 == 0, "int8 adj row tile must be a multiple of 32"

    grid = (n // tm,)
    cp_grid = pltpu.CompilerParams(
        dimension_semantics=("parallel",),   # shard row tiles across TCs (v7x megacore)
        vmem_limit_bytes=vmem_limit)
    cp_flat = pltpu.CompilerParams(vmem_limit_bytes=vmem_limit)

    def resident(a):
        # Constant-index (grid-resident) input: single-buffered, loaded once.
        return pl.BlockSpec(a.shape, lambda i: (0,) * a.ndim,
                            pipeline_mode=pl.Buffered(1))

    def row_tiles(last):
        return pl.BlockSpec((tm, last), lambda i: (i, 0))

    # ---- preamble: x@W1, alpha_src, alpha_dst computed ONCE (not per row tile) ------
    h_bf16, as_row, ad_col = pl.pallas_call(
        project1_kernel,
        out_shape=(jax.ShapeDtypeStruct((n, f_hid), jnp.bfloat16),
                   jax.ShapeDtypeStruct((1, n), jnp.float32),
                   jax.ShapeDtypeStruct((n, 1), jnp.float32)),
        compiler_params=cp_flat,
    )(x, w1, a_src1, a_dst1)

    w2_row = w2.reshape(1, f_hid)

    # ---- layer 1 attention + ReLU, fused with the W2 projection ---------------------
    # TODO(synk): for large N, add a source-node grid axis with flash-style online
    # softmax so the (tm, N) adj slab and resident tensors stay bounded on v7x (64 MiB).
    h2_col = pl.pallas_call(
        gat1_kernel,
        out_shape=jax.ShapeDtypeStruct((n, 1), jnp.float32),
        grid_spec=pl.GridSpec(
            grid=grid,
            in_specs=[row_tiles(n),            # adj slab (int8, double-buffered DMA)
                      resident(h_bf16),        # all source features (bf16, loaded once)
                      resident(as_row),        # alpha_src per source, lane-dense
                      row_tiles(1),            # alpha_dst for the tile's target rows
                      resident(b1),
                      resident(w2_row)],
            out_specs=row_tiles(1),
        ),
        compiler_params=cp_grid,
    )(adj, h_bf16, as_row, ad_col, b1, w2_row)

    # ---- layer 2 attention (f_out == 1) + sigmoid; consumes only adj + h2 -----------
    h2_row = h2_col.reshape(1, n)              # lane-dense view for the source broadcast
    # TODO(synk): module semantics fix the output at (N, 1) (masked per-row stores); a
    # lane-dense [1, N] output layout only pays off for multi-head / larger f_out.
    out = pl.pallas_call(
        gat2_kernel,
        out_shape=jax.ShapeDtypeStruct((n, 1), jnp.float32),
        grid_spec=pl.GridSpec(
            grid=grid,
            in_specs=[row_tiles(n),            # adj slab
                      resident(h2_row),        # h2 per source node (lane-dense)
                      row_tiles(1),            # h2 for the tile's target rows
                      resident(a_src2), resident(a_dst2), resident(b2)],
            out_specs=row_tiles(1),
        ),
        compiler_params=cp_grid,
    )(adj, h2_row, h2_col, a_src2, a_dst2, b2)
    return out


# --------------------------------------------------------------------------- #
# Pure-JAX exact reference (PyG GATConv semantics), for correctness checking.
# --------------------------------------------------------------------------- #
def _gat_layer_ref(x, adj, w, a_src, a_dst, bias):
    h = jnp.dot(x, w)
    ad_col = jnp.dot(h, a_dst.T)                 # [N, 1]
    as_row = jnp.dot(a_src, h.T)                 # [1, N]
    e = ad_col + as_row
    e = jnp.where(e > 0, e, NEG_SLOPE * e)
    e = jnp.where(adj > 0, e, NEG_INF)
    m = jnp.max(e, axis=-1, keepdims=True)
    p = jnp.exp(e - m)
    attn = p / jnp.sum(p, axis=-1, keepdims=True)
    return jnp.dot(attn, h) + bias


def gcn_reference(x, adj, params):
    w1, as1, ad1, b1, w2, as2, ad2, b2 = params
    h1 = jnp.maximum(_gat_layer_ref(x, adj, w1, as1, ad1, b1), 0.0)
    h2 = _gat_layer_ref(h1, adj, w2, as2, ad2, b2)
    return 1.0 / (1.0 + jnp.exp(-h2))


def build_adjacency(edge_index, num_nodes):
    """int8 adj[dst, src] = 1 for each edge, plus self loops (PyG GATConv default)."""
    adj = jnp.zeros((num_nodes, num_nodes), jnp.int8)
    adj = adj.at[edge_index[1], edge_index[0]].set(1)
    adj = adj.at[jnp.arange(num_nodes), jnp.arange(num_nodes)].set(1)
    return adj


def init_params(key, f_in=6, f_hid=128, f_out=1):
    ks = jax.random.split(key, 8)
    scale1 = 1.0 / jnp.sqrt(f_in)
    scale2 = 1.0 / jnp.sqrt(f_hid)
    w1 = jax.random.normal(ks[0], (f_in, f_hid), jnp.float32) * scale1
    a_src1 = jax.random.normal(ks[1], (1, f_hid), jnp.float32) * scale2
    a_dst1 = jax.random.normal(ks[2], (1, f_hid), jnp.float32) * scale2
    b1 = jax.random.normal(ks[3], (1, f_hid), jnp.float32) * 0.01
    w2 = jax.random.normal(ks[4], (f_hid, f_out), jnp.float32) * scale2
    a_src2 = jax.random.normal(ks[5], (1, f_out), jnp.float32)
    a_dst2 = jax.random.normal(ks[6], (1, f_out), jnp.float32)
    b2 = jax.random.normal(ks[7], (1, f_out), jnp.float32) * 0.01
    return (w1, a_src1, a_dst1, b1, w2, a_src2, a_dst2, b2)


if __name__ == "__main__":
    key = jax.random.PRNGKey(0)
    k_x, k_p = jax.random.split(key)

    num_nodes = 64     # small, but enough for a 2-tile grid with int8-aligned tiles
    f_in = 6

    # Deterministic node features (data.x) and a bidirectional ring (data.edge_index).
    x = jax.random.normal(k_x, (num_nodes, f_in), jnp.float32)
    src = jnp.arange(num_nodes, dtype=jnp.int32)
    dst = (src + 1) % num_nodes
    edge_index = jnp.concatenate(
        [jnp.stack([src, dst]), jnp.stack([dst, src])], axis=1)   # [2, 128]
    adj = build_adjacency(edge_index, num_nodes)

    params = init_params(k_p, f_in=f_in, f_hid=128, f_out=1)

    out = gcn_forward(x, adj, params)          # default tm -> 32, grid of 2 row tiles
    out = jax.block_until_ready(out)

    ref = gcn_reference(x, adj, params)
    assert out.shape == (num_nodes, 1)
    assert bool(jnp.all(jnp.isfinite(out)))
    # Tolerance accounts for intentional bf16 exp / bf16 MXU aggregation / approx recip.
    assert bool(jnp.allclose(out, ref, atol=2e-2, rtol=2e-2)), (
        f"max abs diff {float(jnp.max(jnp.abs(out - ref)))}")

    print("KERNEL_OK")
</pallas_src>

<mosaic_0001>
module attributes {stable_mosaic.version = 11 : i64} {
  func.func @project1_kernel(%arg0: memref<64x6xf32, #tpu.memory_space<vmem>>, %arg1: memref<6x128xf32, #tpu.memory_space<vmem>>, %arg2: memref<1x128xf32, #tpu.memory_space<vmem>>, %arg3: memref<1x128xf32, #tpu.memory_space<vmem>>, %arg4: memref<64x128xbf16, #tpu.memory_space<vmem>>, %arg5: memref<1x64xf32, #tpu.memory_space<vmem>>, %arg6: memref<64x1xf32, #tpu.memory_space<vmem>>) attributes {dimension_semantics = [], scalar_prefetch = 0 : i64, scratch_operands = 0 : i64, tpu.core_type = #tpu.core_type<tc>} {
    %c0 = arith.constant 0 : index
    %c0_0 = arith.constant 0 : index
    %0 = vector.load %arg0[%c0, %c0_0] : memref<64x6xf32, #tpu.memory_space<vmem>>, vector<64x6xf32>
    %c0_1 = arith.constant 0 : index
    %c0_2 = arith.constant 0 : index
    %1 = vector.load %arg1[%c0_1, %c0_2] : memref<6x128xf32, #tpu.memory_space<vmem>>, vector<6x128xf32>
    %cst = arith.constant dense<0.000000e+00> : vector<64x128xf32>
    %2 = tpu.matmul %0, %1, %cst {dimension_numbers = #tpu.dot_dimension_numbers<[1], [0], [0], [1], [0, 0, 1, 1], [], []>} : vector<64x6xf32>, vector<6x128xf32>, vector<64x128xf32> -> vector<64x128xf32>
    %c0_3 = arith.constant 0 : index
    %c0_4 = arith.constant 0 : index
    %3 = vector.load %arg2[%c0_3, %c0_4] : memref<1x128xf32, #tpu.memory_space<vmem>>, vector<1x128xf32>
    %cst_5 = arith.constant dense<0.000000e+00> : vector<1x64xf32>
    %4 = tpu.matmul %3, %2, %cst_5 {dimension_numbers = #tpu.dot_dimension_numbers<[1], [1], [0], [0], [0, 0, 1, 0], [], []>} : vector<1x128xf32>, vector<64x128xf32>, vector<1x64xf32> -> vector<1x64xf32>
    %c0_6 = arith.constant 0 : index
    %c0_7 = arith.constant 0 : index
    %5 = vector.load %arg5[%c0_6, %c0_7] : memref<1x64xf32, #tpu.memory_space<vmem>>, vector<1x64xf32>
    tpu.vector_store %arg5[%c0_6, %c0_7], %4 {strides = array<i32>} : memref<1x64xf32, #tpu.memory_space<vmem>>, vector<1x64xf32>,
    %c0_8 = arith.constant 0 : index
    %c0_9 = arith.constant 0 : index
    %6 = vector.load %arg3[%c0_8, %c0_9] : memref<1x128xf32, #tpu.memory_space<vmem>>, vector<1x128xf32>
    %7 = vector.broadcast %6 : vector<1x128xf32> to vector<64x128xf32>
    %8 = arith.mulf %2, %7 : vector<64x128xf32>
    %cst_10 = arith.constant dense<0.000000e+00> : vector<64xf32>
    %9 = vector.multi_reduction <add>, %8, %cst_10 [1] : vector<64x128xf32> to vector<64xf32>
    %10 = vector.shape_cast %9 : vector<64xf32> to vector<64x1xf32>
    %c0_11 = arith.constant 0 : index
    %c0_12 = arith.constant 0 : index
    %11 = vector.load %arg6[%c0_11, %c0_12] : memref<64x1xf32, #tpu.memory_space<vmem>>, vector<64x1xf32>
    tpu.vector_store %arg6[%c0_11, %c0_12], %10 {strides = array<i32>} : memref<64x1xf32, #tpu.memory_space<vmem>>, vector<64x1xf32>,
    %12 = arith.truncf %2 : vector<64x128xf32> to vector<64x128xbf16>
    %c0_13 = arith.constant 0 : index
    %c0_14 = arith.constant 0 : index
    %13 = vector.load %arg4[%c0_13, %c0_14] : memref<64x128xbf16, #tpu.memory_space<vmem>>, vector<64x128xbf16>
    tpu.vector_store %arg4[%c0_13, %c0_14], %12 {strides = array<i32>} : memref<64x128xbf16, #tpu.memory_space<vmem>>, vector<64x128xbf16>,
    return
  }
}

</mosaic_0001>

<llo_original>
// kernel: tpu_custom_call.1
$region0: #{tpu_custom_call.1}
  #allocation0 [shape = 'u32[]', space=smem, size = 0x4, offset = 0x4, fixed_abs, tag = 'smem constant byte address 0x4 - core index']
  #allocation1 [shape = 'u32[144,128]{1,0:T(1,128)}', space=vmem, size = 0x12000, scoped, tag = 'internal scratch']
  %s0 = inlined_call_operand.vmem [shape: f32[64,6], index: 0, kind: input, shape index: {}]
  %s1 = inlined_call_operand.vmem [shape: f32[6,128], index: 1, kind: input, shape index: {}]
  %s2 = inlined_call_operand.vmem [shape: f32[1,128], index: 2, kind: input, shape index: {}]
  %s3 = inlined_call_operand.vmem [shape: f32[1,128], index: 3, kind: input, shape index: {}]
  %s4 = inlined_call_operand.hbm [shape: bf16[64,128], index: 4, kind: output, shape index: {0}]
  %s5 = inlined_call_operand.hbm [shape: f32[1,64], index: 5, kind: output, shape index: {1}]
  %s6 = inlined_call_operand.vmem [shape: f32[64,1], index: 6, kind: output, shape index: {2}]
  %7 = xla_tuple %s4, %s5, %s6
  %s8 = sld [smem:[#allocation0]]
  $region42: #{tpu_custom_call.1} parent=0
    _
  %s10 = ssub.s32 1, %s8
  %s11 = scalar_select 0, %s10, %s8
  $region1: #{tpu_custom_call.1} parent=0
    #allocation2 [shape = 'u8[16384]{0}', space=vmem, size = 0x4000, scoped, tag = 'output window, operand 0, single buffered']
    #allocation3 [shape = 's32[1]{0}', space=sflag, size = 0x4, scoped, tag = 'scoped memory for tpu_custom_call.1']
    #allocation4 [shape = 'u8[512]{0}', space=vmem, size = 0x400, scoped, tag = 'output window, operand 1, single buffered']
    #allocation5 [shape = 's32[1]{0}', space=sflag, size = 0x4, scoped, tag = 'scoped memory for tpu_custom_call.1']
    %12 = vsyncpa [#allocation3], 0
    %13 = vsyncpa [#allocation5], 0
    // Predicated region
    $region2: #{tpu_custom_call.1} parent=1 // pred_check
      _
    $region3: #{tpu_custom_call.1} parent=1 // pred_check_branch
      %15 = sbr.rel (0) target = $region5
    $region4: #{tpu_custom_call.1} parent=1 // pred_region
      _
    $region5: #{tpu_custom_call.1} parent=1 // pred_fallthru
      _
    // Predicated region
    $region6: #{tpu_custom_call.1} parent=1 // pred_check
      _
    $region7: #{tpu_custom_call.1} parent=1 // pred_check_branch
      %17 = sbr.rel (0) target = $region9
    $region8: #{tpu_custom_call.1} parent=1 // pred_region
      _
    $region9: #{tpu_custom_call.1} parent=1 // pred_fallthru
      _
    // Predicated region
    $region10: #{tpu_custom_call.1} parent=1 // pred_check
      _
    $region11: #{tpu_custom_call.1} parent=1 // pred_check_branch
      %19 = sbr.rel (0) target = $region13
    $region12: #{tpu_custom_call.1} parent=1 // pred_region
      _
    $region13: #{tpu_custom_call.1} parent=1 // pred_fallthru
      _
    // Predicated region
    $region14: #{tpu_custom_call.1} parent=1 // pred_check
      _
    $region15: #{tpu_custom_call.1} parent=1 // pred_check_branch
      %21 = sbr.rel (0) target = $region17
    $region16: #{tpu_custom_call.1} parent=1 // pred_region
      _
    $region17: #{tpu_custom_call.1} parent=1 // pred_fallthru
      _
    %v22 = vld [vmem:[%s0] sm:$0xff]
    %v23 = vld [vmem:[%s0 + $0x8] sm:$0xff]
    %v24 = vld [vmem:[%s0 + $0x10] sm:$0xff]
    %v25 = vld [vmem:[%s0 + $0x18] sm:$0xff]
    %v26 = vld [vmem:[%s0 + $0x20] sm:$0xff]
    %v27 = vld [vmem:[%s0 + $0x28] sm:$0xff]
    %v28 = vld [vmem:[%s0 + $0x30] sm:$0xff]
    %v29 = vld [vmem:[%s0 + $0x38] sm:$0xff]
    %v30 = vld [vmem:[%s1] sm:$0x3f]
    %vm31 = vcmask 48128
    %v33 = vsel %vm31, %v22, 0
    %v36 = vsel %vm31, %v23, 0
    %v39 = vsel %vm31, %v24, 0
    %v42 = vsel %vm31, %v25, 0
    %v45 = vsel %vm31, %v26, 0
    %v48 = vsel %vm31, %v27, 0
    %v51 = vsel %vm31, %v28, 0
    %v54 = vsel %vm31, %v29, 0
    %vm56 = vcmask 1045504
    %v58 = vsel %vm56, %v30, 0
    %60 = vmatprep.subr.mxu0 0.0
    %61 = vmatpush1.msra.mxu0 %v58
    %62 = vmatprep.subr.mxu0 0.0
    %63 = vmatpush1.msra.mxu0 0.0
    %64 = vmatprep.subr.mxu0 0.0
    %65 = vmatpush1.msra.mxu0 0.0
    %66 = vmatprep.subr.mxu0 0.0
    %67 = vmatpush1.msra.mxu0 0.0
    %68 = vmatprep.subr.mxu0 0.0
    %69 = vmatpush1.msra.mxu0 0.0
    %70 = vmatprep.subr.mxu0 0.0
    %71 = vmatpush1.msra.mxu0 0.0
    %72 = vmatprep.subr.mxu0 0.0
    %73 = vmatpush1.msra.mxu0 0.0
    %74 = vmatprep.subr.mxu0 0.0
    %75 = vmatpush1.msra.mxu0 0.0
    %76 = vmatprep.subr.mxu0 0.0
    %77 = vmatpush1.msra.mxu0 0.0
    %78 = vmatprep.subr.mxu0 0.0
    %79 = vmatpush1.msra.mxu0 0.0
    %80 = vmatprep.subr.mxu0 0.0
    %81 = vmatpush1.msra.mxu0 0.0
    %82 = vmatprep.subr.mxu0 0.0
    %83 = vmatpush1.msra.mxu0 0.0
    %84 = vmatprep.subr.mxu0 0.0
    %85 = vmatpush1.msra.mxu0 0.0
    %86 = vmatprep.subr.mxu0 0.0
    %87 = vmatpush1.msra.mxu0 0.0
    %88 = vmatprep.subr.mxu0 0.0
    %89 = vmatpush1.msra.mxu0 0.0
    %90 = vmatprep.subr.mxu0 0.0
    %91 = vmatpush1.msra.mxu0 0.0
    %92 = vmatprep.subr.mxu0 0.0
    %93 = vmatpush1.msra.mxu0 0.0
    %94 = vmatprep.subr.mxu0 0.0
    %95 = vmatpush1.msra.mxu0 0.0
    %96 = vmatprep.subr.mxu0 0.0
    %97 = vmatpush1.msra.mxu0 0.0
    %98 = vmatprep.subr.mxu0 0.0
    %99 = vmatpush1.msra.mxu0 0.0
    %100 = vmatprep.subr.mxu0 0.0
    %101 = vmatpush1.msra.mxu0 0.0
    %102 = vmatprep.subr.mxu0 0.0
    %103 = vmatpush1.msra.mxu0 0.0
    %104 = vmatprep.subr.mxu0 0.0
    %105 = vmatpush1.msra.mxu0 0.0
    %106 = vmatprep.subr.mxu0 0.0
    %107 = vmatpush1.msra.mxu0 0.0
    %108 = vmatprep.subr.mxu0 0.0
    %109 = vmatpush1.msra.mxu0 0.0
    %110 = vmatprep.subr.mxu0 0.0
    %111 = vmatpush1.msra.mxu0 0.0
    %112 = vmatprep.subr.mxu0 0.0
    %113 = vmatpush1.msra.mxu0 0.0
    %114 = vmatprep.subr.mxu0 0.0
    %115 = vmatpush1.msra.mxu0 0.0
    %116 = vmatprep.subr.mxu0 0.0
    %117 = vmatpush1.msra.mxu0 0.0
    %118 = vmatprep.subr.mxu0 0.0
    %119 = vmatpush1.msra.mxu0 0.0
    %120 = vmatprep.subr.mxu0 0.0
    %121 = vmatpush1.msra.mxu0 0.0
    %122 = vmatprep.subr.mxu0 0.0
    %123 = vmatpush1.msra.mxu0 0.0
    %124 = vmatprep.mubr.f32.mxu0 0.0
    %125 = vmatmul.mubr.f32.gmra.mrb[0].mxu0 %v33
    %v126 = vpop.f32.mrb[0].mxu0
    %v127 = vadd.f32 0.0, %v126
    %v128 = vpop.f32.mrb[0].mxu0
    %129 = vmatprep.mubr.f32.mxu0 0.0
    %130 = vmatmul.mubr.f32.gmra.mrb[0].mxu0 %v36
    %v131 = vpop.f32.mrb[0].mxu0
    %v132 = vadd.f32 0.0, %v131
    %v133 = vpop.f32.mrb[0].mxu0
    %134 = vmatprep.mubr.f32.mxu0 0.0
    %135 = vmatmul.mubr.f32.gmra.mrb[0].mxu0 %v39
    %v136 = vpop.f32.mrb[0].mxu0
    %v137 = vadd.f32 0.0, %v136
    %v138 = vpop.f32.mrb[0].mxu0
    %139 = vmatprep.mubr.f32.mxu0 0.0
    %140 = vmatmul.mubr.f32.gmra.mrb[0].mxu0 %v42
    %v141 = vpop.f32.mrb[0].mxu0
    %v142 = vadd.f32 0.0, %v141
    %v143 = vpop.f32.mrb[0].mxu0
    %144 = vmatprep.mubr.f32.mxu0 0.0
    %145 = vmatmul.mubr.f32.gmra.mrb[0].mxu0 %v45
    %v146 = vpop.f32.mrb[0].mxu0
    %v147 = vadd.f32 0.0, %v146
    %v148 = vpop.f32.mrb[0].mxu0
    %149 = vmatprep.mubr.f32.mxu0 0.0
    %150 = vmatmul.mubr.f32.gmra.mrb[0].mxu0 %v48
    %v151 = vpop.f32.mrb[0].mxu0
    %v152 = vadd.f32 0.0, %v151
    %v153 = vpop.f32.mrb[0].mxu0
    %154 = vmatprep.mubr.f32.mxu0 0.0
    %155 = vmatmul.mubr.f32.gmra.mrb[0].mxu0 %v51
    %v156 = vpop.f32.mrb[0].mxu0
    %v157 = vadd.f32 0.0, %v156
    %v158 = vpop.f32.mrb[0].mxu0
    %159 = vmatprep.mubr.f32.mxu0 0.0
    %160 = vmatmul.mubr.f32.gmra.mrb[0].mxu0 %v54
    %v161 = vpop.f32.mrb[0].mxu0
    %v162 = vadd.f32 0.0, %v161
    %v163 = vpop.f32.mrb[0].mxu0
    %164 = vdwg.mxu0
    %v165 = vld [vmem:[%s2] sm:$0x1]
    %166 = vmatprep.subr.mxu0 0.0
    %167 = vmatpush1.xpose.msra.mxu0 %v127
    %168 = vmatprep.subr.mxu0 0.0
    %169 = vmatpush1.xpose.msra.mxu0 %v132
    %170 = vmatprep.subr.mxu0 0.0
    %171 = vmatpush1.xpose.msra.mxu0 %v137
    %172 = vmatprep.subr.mxu0 0.0
    %173 = vmatpush1.xpose.msra.mxu0 %v142
    %174 = vmatprep.subr.mxu0 0.0
    %175 = vmatpush1.xpose.msra.mxu0 %v147
    %176 = vmatprep.subr.mxu0 0.0
    %177 = vmatpush1.xpose.msra.mxu0 %v152
    %178 = vmatprep.subr.mxu0 0.0
    %179 = vmatpush1.xpose.msra.mxu0 %v157
    %180 = vmatprep.subr.mxu0 0.0
    %181 = vmatpush1.xpose.msra.mxu0 %v162
    %182 = vmatprep.subr.mxu0 0.0
    %183 = vmatpush1.xpose.msra.mxu0 0.0
    %184 = vmatprep.subr.mxu0 0.0
    %185 = vmatpush1.xpose.msra.mxu0 0.0
    %186 = vmatprep.subr.mxu0 0.0
    %187 = vmatpush1.xpose.msra.mxu0 0.0
    %188 = vmatprep.subr.mxu0 0.0
    %189 = vmatpush1.xpose.msra.mxu0 0.0
    %190 = vmatprep.subr.mxu0 0.0
    %191 = vmatpush1.xpose.msra.mxu0 0.0
    %192 = vmatprep.subr.mxu0 0.0
    %193 = vmatpush1.xpose.msra.mxu0 0.0
    %194 = vmatprep.subr.mxu0 0.0
    %195 = vmatpush1.xpose.msra.mxu0 0.0
    %196 = vmatprep.subr.mxu0 0.0
    %197 = vmatpush1.xpose.msra.mxu0 0.0
    %198 = vmatprep.subr.mxu0 0.0
    %199 = vmatpush1.xpose.msra.mxu0 0.0
    %200 = vmatprep.subr.mxu0 0.0
    %201 = vmatpush1.xpose.msra.mxu0 0.0
    %202 = vmatprep.subr.mxu0 0.0
    %203 = vmatpush1.xpose.msra.mxu0 0.0
    %204 = vmatprep.subr.mxu0 0.0
    %205 = vmatpush1.xpose.msra.mxu0 0.0
    %206 = vmatprep.subr.mxu0 0.0
    %207 = vmatpush1.xpose.msra.mxu0 0.0
    %208 = vmatprep.subr.mxu0 0.0
    %209 = vmatpush1.xpose.msra.mxu0 0.0
    %210 = vmatprep.subr.mxu0 0.0
    %211 = vmatpush1.xpose.msra.mxu0 0.0
    %212 = vmatprep.subr.mxu0 0.0
    %213 = vmatpush1.xpose.msra.mxu0 0.0
    %214 = vmatprep.subr.mxu0 0.0
    %215 = vmatpush1.xpose.msra.mxu0 0.0
    %216 = vmatprep.subr.mxu0 0.0
    %217 = vmatpush1.xpose.msra.mxu0 0.0
    %218 = vmatprep.subr.mxu0 0.0
    %219 = vmatpush1.xpose.msra.mxu0 0.0
    %220 = vmatprep.subr.mxu0 0.0
    %221 = vmatpush1.xpose.msra.mxu0 0.0
    %222 = vmatprep.subr.mxu0 0.0
    %223 = vmatpush1.xpose.msra.mxu0 0.0
    %224 = vmatprep.subr.mxu0 0.0
    %225 = vmatpush1.xpose.msra.mxu0 0.0
    %226 = vmatprep.subr.mxu0 0.0
    %227 = vmatpush1.xpose.msra.mxu0 0.0
    %228 = vmatprep.subr.mxu0 0.0
    %229 = vmatpush1.xpose.msra.mxu0 0.0
    %230 = vmatprep.mubr.f32.mxu0 0.0
    %231 = vmatmul.mubr.f32.gmra.mrb[0].mxu0 %v165
    %v232 = vpop.f32.mrb[0].mxu0
    %v233 = vadd.f32 0.0, %v232
    %v234 = vpop.f32.mrb[0].mxu0
    %235 = vdwg.mxu0
    %vm236 = vcmask 516096
    %237 = vst.msk [vmem:[#allocation4] sm:$0x1] %vm236, %v233
    %v238 = vld [vmem:[%s3] sm:$0x1]
    %v240 = vlaneseq
    %v241 = vshrl.u32 %v240, 7
    %v242 = vsub.s32 0, %v241
    %v243 = vrot.slane %v238, %v242
    %v245 = vmul.f32 %v127, %v243
    %v246 = vmul.f32 %v132, %v243
    %v247 = vmul.f32 %v137, %v243
    %v248 = vmul.f32 %v142, %v243
    %v249 = vmul.f32 %v147, %v243
    %v250 = vmul.f32 %v152, %v243
    %v251 = vmul.f32 %v157, %v243
    %v252 = vmul.f32 %v162, %v243
    %253 = vadd.xlane.f32.xlu0 %v245
    %v254 = vpop.xlane.xlu0 %253
    %255 = vadd.xlane.f32.xlu0 %v246
    %v256 = vpop.xlane.xlu0 %255
    %257 = vadd.xlane.f32.xlu0 %v247
    %v258 = vpop.xlane.xlu0 %257
    %259 = vadd.xlane.f32.xlu0 %v248
    %v260 = vpop.xlane.xlu0 %259
    %261 = vadd.xlane.f32.xlu0 %v249
    %v262 = vpop.xlane.xlu0 %261
    %263 = vadd.xlane.f32.xlu0 %v250
    %v264 = vpop.xlane.xlu0 %263
    %265 = vadd.xlane.f32.xlu0 %v251
    %v266 = vpop.xlane.xlu0 %265
    %267 = vadd.xlane.f32.xlu0 %v252
    %v268 = vpop.xlane.xlu0 %267
    %vm269 = vcmask 7168
    %270 = vst.msk [vmem:[%s6] sm:$0xff] %vm269, %v254
    %271 = vst.msk [vmem:[%s6 + $0x8] sm:$0xff] %vm269, %v256
    %272 = vst.msk [vmem:[%s6 + $0x10] sm:$0xff] %vm269, %v258
    %273 = vst.msk [vmem:[%s6 + $0x18] sm:$0xff] %vm269, %v260
    %274 = vst.msk [vmem:[%s6 + $0x20] sm:$0xff] %vm269, %v262
    %275 = vst.msk [vmem:[%s6 + $0x28] sm:$0xff] %vm269, %v264
    %276 = vst.msk [vmem:[%s6 + $0x30] sm:$0xff] %vm269, %v266
    %277 = vst.msk [vmem:[%s6 + $0x38] sm:$0xff] %vm269, %v268
    %v278 = vpack.c.bf16 %v132, %v127
    %v279 = vpack.c.bf16 %v142, %v137
    %v280 = vpack.c.bf16 %v152, %v147
    %v281 = vpack.c.bf16 %v162, %v157
    %v286 = vunpack.c.l.b16 %v278
    %v287 = vunpack.c.h.b16 %v278
    %v288 = vunpack.c.l.b16 %v279
    %v289 = vunpack.c.h.b16 %v279
    %v290 = vunpack.c.l.b16 %v280
    %v291 = vunpack.c.h.b16 %v280
    %v292 = vunpack.c.l.b16 %v281
    %v293 = vunpack.c.h.b16 %v281
    %v294 = vpack.c.b16 %v286, %v286
    %v295 = vpack.c.b16 %v287, %v287
    %v296 = vpack.c.b16 %v288, %v288
    %v297 = vpack.c.b16 %v289, %v289
    %v298 = vpack.c.b16 %v290, %v290
    %v299 = vpack.c.b16 %v291, %v291
    %v300 = vpack.c.b16 %v292, %v292
    %v301 = vpack.c.b16 %v293, %v293
    %310 = vst [vmem:[#allocation2] sm:$0xf] %v294
    %311 = vst [vmem:[#allocation2 + $0x4] sm:$0xf] %v295
    %312 = vst [vmem:[#allocation2 + $0x8] sm:$0xf] %v296
    %313 = vst [vmem:[#allocation2 + $0xc] sm:$0xf] %v297
    %314 = vst [vmem:[#allocation2 + $0x10] sm:$0xf] %v298
    %315 = vst [vmem:[#allocation2 + $0x14] sm:$0xf] %v299
    %316 = vst [vmem:[#allocation2 + $0x18] sm:$0xf] %v300
    %317 = vst [vmem:[#allocation2 + $0x1c] sm:$0xf] %v301
    // Predicated region
    $region18: #{tpu_custom_call.1} parent=1 // pred_check
      _
    $region19: #{tpu_custom_call.1} parent=1 // pred_check_branch
      %319 = sbr.rel (0) target = $region21
    $region20: #{tpu_custom_call.1} parent=1 // pred_region
      %s321 = ssub.s32 512, 512
      %322 = vsyncadd [#allocation3], %s321
      %s323 = sshll.u32 [#allocation2], 4
      %s324 = int_to_ptr.vmem [resolvable:$true] %s323
      %329 = dma.vmem_to_hbm [thread:$0]  %s324, 512, %s4, [#allocation3], 64, 64, 4
    $region21: #{tpu_custom_call.1} parent=1 // pred_fallthru
      _
    // Predicated region
    $region22: #{tpu_custom_call.1} parent=1 // pred_check
      _
    $region23: #{tpu_custom_call.1} parent=1 // pred_check_branch
      %331 = sbr.rel (0) target = $region25
    $region24: #{tpu_custom_call.1} parent=1 // pred_region
      %s333 = ssub.s32 16, 16
      %334 = vsyncadd [#allocation5], %s333
      %s336 = sshll.u32 [#allocation4], 4
      %s337 = int_to_ptr.vmem [resolvable:$true] %s336
      %339 = dma.vmem_to_hbm [thread:$0]  %s337, 16, %s5, [#allocation5]
    $region25: #{tpu_custom_call.1} parent=1 // pred_fallthru
      _
    // Predicated region
    $region26: #{tpu_custom_call.1} parent=1 // pred_check
      _
    $region27: #{tpu_custom_call.1} parent=1 // pred_check_branch
      %341 = sbr.rel (0) target = $region29
    $region28: #{tpu_custom_call.1} parent=1 // pred_region
      _
    $region29: #{tpu_custom_call.1} parent=1 // pred_fallthru
      _
    // Predicated region
    $region30: #{tpu_custom_call.1} parent=1 // pred_check
      _
    $region31: #{tpu_custom_call.1} parent=1 // pred_check_branch
      %343 = sbr.rel (0) target = $region33
    $region32: #{tpu_custom_call.1} parent=1 // pred_region
      %344 = dma.done [#allocation3], 512
    $region33: #{tpu_custom_call.1} parent=1 // pred_fallthru
      _
    // Predicated region
    $region34: #{tpu_custom_call.1} parent=1 // pred_check
      _
    $region35: #{tpu_custom_call.1} parent=1 // pred_check_branch
      %346 = sbr.rel (0) target = $region37
    $region36: #{tpu_custom_call.1} parent=1 // pred_region
      %347 = dma.done [#allocation5], 16
    $region37: #{tpu_custom_call.1} parent=1 // pred_fallthru
      _
    // Predicated region
    $region38: #{tpu_custom_call.1} parent=1 // pred_check
      _
    $region39: #{tpu_custom_call.1} parent=1 // pred_check_branch
      %349 = sbr.rel (0) target = $region41
    $region40: #{tpu_custom_call.1} parent=1 // pred_region
      _
    $region41: #{tpu_custom_call.1} parent=1 // pred_fallthru
      _
    %350 = vsyncpa [#allocation3], 1
    %351 = vsyncpa [#allocation5], 1

</llo_original>
